<compile_context>
chip_gen: v7x
topology: tpu7x:2x2x1
jax: 0.10.0
libtpu: 0.0.40
codegen_flags: <defaults>
</compile_context>

<pallas_src>
import math
import functools

import numpy as np
import jax
import jax.numpy as jnp
from jax.experimental import pallas as pl
from jax.experimental.pallas import tpu as pltpu

_MIB = 1024 * 1024


def _round_up(x, m):
    return ((x + m - 1) // m) * m


def _gelu_erf(y):
    """BERT gelu: y * 0.5 * (1 + erf(y / sqrt(2))).

    erf via Abramowitz & Stegun 7.1.26 (max abs error 1.5e-7): one exp() on
    the EUP slot + a handful of VPU ops, instead of lax.erf's long VALU-only
    polynomial which caps throughput once the matmul runs in bf16.
    """
    z = y * jnp.float32(1.0 / math.sqrt(2.0))
    a = jnp.abs(z)
    t = 1.0 / (1.0 + jnp.float32(0.3275911) * a)
    poly = t * (jnp.float32(0.254829592) + t * (jnp.float32(-0.284496736) + t * (
        jnp.float32(1.421413741) + t * (jnp.float32(-1.453152027)
                                        + t * jnp.float32(1.061405429)))))
    erf_a = 1.0 - poly * jnp.exp(-(a * a))           # exp -> EUP
    erf_z = jnp.where(z < 0.0, -erf_a, erf_a)
    return y * 0.5 * (1.0 + erf_z)


def _bert_intermediate_kernel(x_ref, w_ref, b_ref, o_ref, *, compute_dtype):
    # x_ref: (tm, H)  tile of flattened hidden_states (input dtype, no HBM cast)
    # w_ref: (tn, H)  weight tile in its native PyTorch [I, H] layout
    # b_ref: (1,  tn) bias slice (f32)
    # o_ref: (tm, tn) output tile (lane-dense along the intermediate dim)
    x = x_ref[...]
    w = w_ref[...]
    if x.dtype != compute_dtype:
        x = x.astype(compute_dtype)   # in-kernel cast: free VPU slots, no extra HBM pass
    if w.dtype != compute_dtype:
        w = w.astype(compute_dtype)
    # NT matmul (contract on H of both operands): MXU feeds the transposed RHS
    # natively, so the weight never takes an HBM or XLU transpose.
    y = jax.lax.dot_general(
        x, w,
        dimension_numbers=(((1,), (1,)), ((), ())),
        preferred_element_type=jnp.float32)
    y = y + b_ref[...]
    o_ref[...] = _gelu_erf(y).astype(o_ref.dtype)


def _choose_tiles(M, H, I, in_sz, w_sz, out_sz, budget_bytes):
    """Pick (tm, tn) so double-buffered x/W/out tiles fit the VMEM budget."""
    # sublane granularity for the row dim must satisfy both the x array (input
    # dtype) and the output array (out dtype): 16 if either is 2-byte.
    sub = 16 if (in_sz == 2 or out_sz == 2) else 8
    i_pad = _round_up(I, 128)
    m_cap = _round_up(M, sub)

    def vmem(tm, tn):
        # 2x for double buffering of each pipelined tile (+ bias slice).
        return 2 * (tm * H * in_sz + tn * H * w_sz + tm * tn * out_sz + tn * 4)

    # tn: full intermediate dim (weight resident, x streamed once) if it fits
    # next to a reasonable row tile; otherwise 128-multiple slices (v7x /
    # BERT-large f32 fallback).
    tm_floor = min(m_cap, _round_up(min(256, m_cap), sub))
    tn = 128
    for cand in (i_pad, 4096, 2048, 1024, 512, 256, 128):
        cand = min(cand, i_pad)
        if vmem(tm_floor, cand) <= budget_bytes:
            tn = cand
            break

    # tm: largest row tile that still fits next to that weight slab.
    tm = min(m_cap, sub)
    for cand in (2048, 1024, 512, 256, 128, 64, 32, 16, 8):
        cand = min(_round_up(cand, sub), m_cap)
        if vmem(cand, tn) <= budget_bytes:
            tm = cand
            break
    return tm, tn


@functools.partial(jax.jit,
                   static_argnames=("out_dtype", "compute_dtype", "vmem_budget_bytes"))
def bert_intermediate(hidden_states, weight, bias, *, out_dtype=None,
                      compute_dtype=None, vmem_budget_bytes=36 * _MIB):
    """hidden_states: [B, S, H]; weight: [I, H] (PyTorch layout); bias: [I].

    * For the bf16 fast path (recommended on v5e/v6e/v7x), cast `weight` to
      bf16 ONCE at parameter-prep time and pass it in; activations are cast
      in-kernel and accumulation / bias / gelu stay in f32.
    * out_dtype (e.g. jnp.bfloat16) halves the M*I output HBM stream for
      callers that accept bf16 activations; default keeps the input dtype.
    """
    B, S, H = hidden_states.shape
    I, Hw = weight.shape
    assert Hw == H, "weight must be [intermediate, hidden] (PyTorch layout)"
    M = B * S

    out_dt = np.dtype(hidden_states.dtype) if out_dtype is None else np.dtype(out_dtype)
    if compute_dtype is None:
        # Follow the narrower operand: bf16 weights (prep-time cast) turn on
        # the bf16 MXU path without any per-call HBM cast of x.
        cdt = (np.dtype(weight.dtype)
               if np.dtype(weight.dtype).itemsize <= np.dtype(hidden_states.dtype).itemsize
               else np.dtype(hidden_states.dtype))
    else:
        cdt = np.dtype(compute_dtype)

    x2d = hidden_states.reshape(M, H)                 # no dtype cast, no pad
    b2d = bias.astype(jnp.float32).reshape(1, I)      # tiny; negligible

    in_sz = np.dtype(x2d.dtype).itemsize
    w_sz = np.dtype(weight.dtype).itemsize
    out_sz = out_dt.itemsize
    tm, tn = _choose_tiles(M, H, I, in_sz, w_sz, out_sz, vmem_budget_bytes)

    # Weight axis outermost so the (tn, H) weight tile stays resident across
    # the inner row loop; both axes independent -> parallel (megacore). With
    # the usual full-I residency the j axis collapses to 1 and the row axis is
    # the one sharded across TensorCores on v7x.
    grid = (pl.cdiv(I, tn), pl.cdiv(M, tm))

    cost = pl.CostEstimate(
        flops=2 * M * I * H,
        transcendentals=M * I,
        bytes_accessed=M * H * in_sz + I * H * w_sz + I * 4 + M * I * out_sz)

    out2d = pl.pallas_call(
        functools.partial(_bert_intermediate_kernel, compute_dtype=cdt),
        out_shape=jax.ShapeDtypeStruct((M, I), out_dt),
        grid_spec=pl.GridSpec(
            grid=grid,
            in_specs=[
                pl.BlockSpec((tm, H), lambda j, i: (i, 0)),   # x rows
                pl.BlockSpec((tn, H), lambda j, i: (j, 0)),   # weight slice
                pl.BlockSpec((1, tn), lambda j, i: (0, j)),   # bias slice
            ],
            out_specs=pl.BlockSpec((tm, tn), lambda j, i: (i, j)),
        ),
        compiler_params=pltpu.CompilerParams(
            dimension_semantics=("parallel", "parallel"),
            vmem_limit_bytes=48 * _MIB,
        ),
        cost_estimate=cost,
    )(x2d, weight, b2d)

    return out2d.reshape(B, S, I)


def _reference(hidden_states, weight, bias):
    y = jnp.einsum("bsh,ih->bsi",
                   hidden_states.astype(jnp.float32),
                   weight.astype(jnp.float32)) + bias.astype(jnp.float32)
    return y * 0.5 * (1.0 + jax.lax.erf(y / jnp.float32(math.sqrt(2.0))))


# TODO(synk): reorder_neurons() mutates parameters in place and is not part of
# the forward pass; it is intentionally not implemented as a kernel.

if __name__ == "__main__":
    key = jax.random.PRNGKey(0)

    # Case 1: small BERT-like config (batch=2, seq=8, hidden=32, intermediate=128)
    B, S, H, I = 2, 8, 32, 128
    k_x, k_w, k_b, key = jax.random.split(key, 4)
    hidden_states = jax.random.normal(k_x, (B, S, H), dtype=jnp.float32)
    weight = jax.random.normal(k_w, (I, H), dtype=jnp.float32) * 0.02
    bias = jax.random.normal(k_b, (I,), dtype=jnp.float32) * 0.02

    out = jax.block_until_ready(bert_intermediate(hidden_states, weight, bias))
    ref = _reference(hidden_states, weight, bias)
    assert out.shape == (B, S, I)
    assert jnp.allclose(out, ref, atol=1e-5, rtol=1e-5)

    # Case 2: ragged shapes exercise the partial-final-block path (no jnp.pad)
    B2, S2, H2, I2 = 2, 7, 32, 96
    k_x, k_w, k_b, key = jax.random.split(key, 4)
    hs2 = jax.random.normal(k_x, (B2, S2, H2), dtype=jnp.float32)
    w2 = jax.random.normal(k_w, (I2, H2), dtype=jnp.float32) * 0.02
    b2 = jax.random.normal(k_b, (I2,), dtype=jnp.float32) * 0.02
    out2 = jax.block_until_ready(bert_intermediate(hs2, w2, b2))
    ref2 = _reference(hs2, w2, b2)
    assert out2.shape == (B2, S2, I2)
    assert jnp.allclose(out2, ref2, atol=1e-5, rtol=1e-5)

    # Case 3: bf16 weights (one-time parameter-prep cast, outside the hot path)
    # -> bf16 MXU operands, x cast in-kernel, f32 accumulate / bias / gelu.
    w_bf16 = weight.astype(jnp.bfloat16)
    out3 = jax.block_until_ready(bert_intermediate(hidden_states, w_bf16, bias))
    assert out3.shape == (B, S, I) and out3.dtype == jnp.float32
    assert jnp.allclose(out3, ref, atol=5e-2, rtol=5e-2)

    # Case 4: bf16 output stream (halves the dominant M*I HBM write)
    out4 = jax.block_until_ready(
        bert_intermediate(hidden_states, w_bf16, bias, out_dtype=jnp.bfloat16))
    assert out4.shape == (B, S, I) and out4.dtype == jnp.bfloat16
    assert jnp.allclose(out4.astype(jnp.float32), ref, atol=5e-2, rtol=5e-2)

    print("KERNEL_OK")
</pallas_src>

<mosaic_0001>
module attributes {stable_mosaic.version = 11 : i64} {
  func.func @_bert_intermediate_kernel(%arg0: i32, %arg1: i32, %arg2: memref<16x32xf32, #tpu.memory_space<vmem>>, %arg3: memref<128x32xf32, #tpu.memory_space<vmem>>, %arg4: memref<1x128xf32, #tpu.memory_space<vmem>>, %arg5: memref<16x128xf32, #tpu.memory_space<vmem>>) attributes {dimension_semantics = [#tpu.dimension_semantics<parallel>, #tpu.dimension_semantics<parallel>], iteration_bounds = array<i64: 1, 1>, scalar_prefetch = 0 : i64, scratch_operands = 0 : i64, tpu.core_type = #tpu.core_type<tc>, window_params = [{transform_indices = @transform_0, window_bounds = array<i64: 16, 32>}, {transform_indices = @transform_1, window_bounds = array<i64: 128, 32>}, {transform_indices = @transform_2, window_bounds = array<i64: 1, 128>}, {transform_indices = @transform_3, window_bounds = array<i64: 16, 128>}]} {
    %c0 = arith.constant 0 : index
    %c0_0 = arith.constant 0 : index
    %0 = vector.load %arg2[%c0, %c0_0] : memref<16x32xf32, #tpu.memory_space<vmem>>, vector<16x32xf32>
    %c0_1 = arith.constant 0 : index
    %c0_2 = arith.constant 0 : index
    %1 = vector.load %arg3[%c0_1, %c0_2] : memref<128x32xf32, #tpu.memory_space<vmem>>, vector<128x32xf32>
    %cst = arith.constant dense<0.000000e+00> : vector<16x128xf32>
    %2 = tpu.matmul %0, %1, %cst {dimension_numbers = #tpu.dot_dimension_numbers<[1], [1], [0], [0], [0, 0, 1, 0], [], []>} : vector<16x32xf32>, vector<128x32xf32>, vector<16x128xf32> -> vector<16x128xf32>
    %c0_3 = arith.constant 0 : index
    %c0_4 = arith.constant 0 : index
    %3 = vector.load %arg4[%c0_3, %c0_4] : memref<1x128xf32, #tpu.memory_space<vmem>>, vector<1x128xf32>
    %4 = vector.broadcast %3 : vector<1x128xf32> to vector<16x128xf32>
    %5 = arith.addf %2, %4 : vector<16x128xf32>
    %cst_5 = arith.constant 0.707106769 : f32
    %6 = vector.broadcast %cst_5 : f32 to vector<16x128xf32>
    %7 = arith.mulf %5, %6 : vector<16x128xf32>
    %8 = math.absf %7 : vector<16x128xf32>
    %cst_6 = arith.constant 0.327591091 : f32
    %9 = vector.broadcast %cst_6 : f32 to vector<16x128xf32>
    %10 = arith.mulf %9, %8 : vector<16x128xf32>
    %cst_7 = arith.constant 1.000000e+00 : f32
    %11 = vector.broadcast %cst_7 : f32 to vector<16x128xf32>
    %12 = arith.addf %11, %10 : vector<16x128xf32>
    %cst_8 = arith.constant 1.000000e+00 : f32
    %13 = vector.broadcast %cst_8 : f32 to vector<16x128xf32>
    %14 = arith.divf %13, %12 : vector<16x128xf32>
    %cst_9 = arith.constant 1.06140542 : f32
    %15 = vector.broadcast %cst_9 : f32 to vector<16x128xf32>
    %16 = arith.mulf %14, %15 : vector<16x128xf32>
    %cst_10 = arith.constant -1.45315206 : f32
    %17 = vector.broadcast %cst_10 : f32 to vector<16x128xf32>
    %18 = arith.addf %17, %16 : vector<16x128xf32>
    %19 = arith.mulf %14, %18 : vector<16x128xf32>
    %cst_11 = arith.constant 1.42141378 : f32
    %20 = vector.broadcast %cst_11 : f32 to vector<16x128xf32>
    %21 = arith.addf %20, %19 : vector<16x128xf32>
    %22 = arith.mulf %14, %21 : vector<16x128xf32>
    %cst_12 = arith.constant -0.284496725 : f32
    %23 = vector.broadcast %cst_12 : f32 to vector<16x128xf32>
    %24 = arith.addf %23, %22 : vector<16x128xf32>
    %25 = arith.mulf %14, %24 : vector<16x128xf32>
    %cst_13 = arith.constant 0.254829586 : f32
    %26 = vector.broadcast %cst_13 : f32 to vector<16x128xf32>
    %27 = arith.addf %26, %25 : vector<16x128xf32>
    %28 = arith.mulf %14, %27 : vector<16x128xf32>
    %29 = arith.mulf %8, %8 : vector<16x128xf32>
    %cst_14 = arith.constant 0.000000e+00 : f32
    %30 = vector.broadcast %cst_14 : f32 to vector<16x128xf32>
    %31 = arith.subf %30, %29 : vector<16x128xf32>
    %32 = math.exp %31 : vector<16x128xf32>
    %33 = arith.mulf %28, %32 : vector<16x128xf32>
    %cst_15 = arith.constant 1.000000e+00 : f32
    %34 = vector.broadcast %cst_15 : f32 to vector<16x128xf32>
    %35 = arith.subf %34, %33 : vector<16x128xf32>
    %cst_16 = arith.constant 0.000000e+00 : f32
    %36 = vector.broadcast %cst_16 : f32 to vector<16x128xf32>
    %37 = arith.cmpf olt, %7, %36 : vector<16x128xf32>
    %cst_17 = arith.constant 0.000000e+00 : f32
    %38 = vector.broadcast %cst_17 : f32 to vector<16x128xf32>
    %39 = arith.subf %38, %35 : vector<16x128xf32>
    %40 = arith.select %37, %39, %35 : vector<16x128xi1>, vector<16x128xf32>
    %cst_18 = arith.constant 5.000000e-01 : f32
    %41 = vector.broadcast %cst_18 : f32 to vector<16x128xf32>
    %42 = arith.mulf %5, %41 : vector<16x128xf32>
    %cst_19 = arith.constant 1.000000e+00 : f32
    %43 = vector.broadcast %cst_19 : f32 to vector<16x128xf32>
    %44 = arith.addf %43, %40 : vector<16x128xf32>
    %45 = arith.mulf %42, %44 : vector<16x128xf32>
    %c0_20 = arith.constant 0 : index
    %c0_21 = arith.constant 0 : index
    %46 = vector.load %arg5[%c0_20, %c0_21] : memref<16x128xf32, #tpu.memory_space<vmem>>, vector<16x128xf32>
    tpu.vector_store %arg5[%c0_20, %c0_21], %45 {strides = array<i32>} : memref<16x128xf32, #tpu.memory_space<vmem>>, vector<16x128xf32>,
    return
  }
  func.func @transform_0(%arg0: i32, %arg1: i32) -> (i32, i32) {
    %c0_i32 = arith.constant 0 : i32
    %c0_i32_0 = arith.constant 0 : i32
    return %arg1, %c0_i32 : i32, i32
  }
  func.func @transform_1(%arg0: i32, %arg1: i32) -> (i32, i32) {
    %c0_i32 = arith.constant 0 : i32
    %c0_i32_0 = arith.constant 0 : i32
    return %arg0, %c0_i32 : i32, i32
  }
  func.func @transform_2(%arg0: i32, %arg1: i32) -> (i32, i32) {
    %c0_i32 = arith.constant 0 : i32
    %c0_i32_0 = arith.constant 0 : i32
    return %c0_i32, %arg0 : i32, i32
  }
  func.func @transform_3(%arg0: i32, %arg1: i32) -> (i32, i32) {
    %c0_i32 = arith.constant 0 : i32
    return %arg1, %arg0 : i32, i32
  }
}

</mosaic_0001>

<llo_original>
// kernel: bert_intermediate.1
$region0: #{bert_intermediate.1}
  #allocation0 [shape = 'u32[]', space=smem, size = 0x4, offset = 0x4, fixed_abs, tag = 'smem constant byte address 0x4 - core index']
  #allocation1 [shape = 'u32[144,128]{1,0:T(1,128)}', space=vmem, size = 0x12000, scoped, tag = 'internal scratch']
  %s0 = inlined_call_operand.vmem [shape: f32[16,32], index: 0, kind: input, shape index: {}]
  %s1 = inlined_call_operand.vmem [shape: f32[128,32], index: 1, kind: input, shape index: {}]
  %s2 = inlined_call_operand.vmem [shape: f32[1,128], index: 2, kind: input, shape index: {}]
  %s3 = inlined_call_operand.hbm [shape: f32[16,128], index: 3, kind: output, shape index: {}]
  %s4 = sld [smem:[#allocation0]]
  $region22: #{bert_intermediate.1} parent=0
    _
  %s6 = ssub.s32 1, %s4
  %s7 = scalar_select 0, %s6, %s4
  $region1: #{bert_intermediate.1} parent=0
    #allocation2 [shape = 'u8[8192]{0}', space=vmem, size = 0x2000, scoped, tag = 'output window, operand 0, single buffered']
    #allocation3 [shape = 's32[1]{0}', space=sflag, size = 0x4, scoped, tag = 'scoped memory for bert_intermediate.1']
    %8 = vsyncpa [#allocation3], 0
    // Predicated region
    $region2: #{bert_intermediate.1} parent=1 // pred_check
      _
    $region3: #{bert_intermediate.1} parent=1 // pred_check_branch
      %10 = sbr.rel (0) target = $region5
    $region4: #{bert_intermediate.1} parent=1 // pred_region
      _
    $region5: #{bert_intermediate.1} parent=1 // pred_fallthru
      _
    // Predicated region
    $region6: #{bert_intermediate.1} parent=1 // pred_check
      _
    $region7: #{bert_intermediate.1} parent=1 // pred_check_branch
      %12 = sbr.rel (0) target = $region9
    $region8: #{bert_intermediate.1} parent=1 // pred_region
      _
    $region9: #{bert_intermediate.1} parent=1 // pred_fallthru
      _
    // Predicated region
    $region10: #{bert_intermediate.1} parent=1 // pred_check
      _
    $region11: #{bert_intermediate.1} parent=1 // pred_check_branch
      %14 = sbr.rel (0) target = $region13
    $region12: #{bert_intermediate.1} parent=1 // pred_region
      _
    $region13: #{bert_intermediate.1} parent=1 // pred_fallthru
      _
    %v15 = vld [vmem:[%s0] sm:$0xff]
    %v16 = vld [vmem:[%s0 + $0x8] sm:$0xff]
    %v17 = vld [vmem:[%s1] sm:$0xff]
    %v18 = vld [vmem:[%s1 + $0x8] sm:$0xff]
    %v19 = vld [vmem:[%s1 + $0x10] sm:$0xff]
    %v20 = vld [vmem:[%s1 + $0x18] sm:$0xff]
    %v21 = vld [vmem:[%s1 + $0x20] sm:$0xff]
    %v22 = vld [vmem:[%s1 + $0x28] sm:$0xff]
    %v23 = vld [vmem:[%s1 + $0x30] sm:$0xff]
    %v24 = vld [vmem:[%s1 + $0x38] sm:$0xff]
    %v25 = vld [vmem:[%s1 + $0x40] sm:$0xff]
    %v26 = vld [vmem:[%s1 + $0x48] sm:$0xff]
    %v27 = vld [vmem:[%s1 + $0x50] sm:$0xff]
    %v28 = vld [vmem:[%s1 + $0x58] sm:$0xff]
    %v29 = vld [vmem:[%s1 + $0x60] sm:$0xff]
    %v30 = vld [vmem:[%s1 + $0x68] sm:$0xff]
    %v31 = vld [vmem:[%s1 + $0x70] sm:$0xff]
    %v32 = vld [vmem:[%s1 + $0x78] sm:$0xff]
    %v33 = vld [vmem:[%s2] sm:$0x1]
    %v35 = vlaneseq
    %v36 = vshrl.u32 %v35, 7
    %v37 = vsub.s32 0, %v36
    %v38 = vrot.slane %v33, %v37
    %vm40 = vcmask 261120
    %v42 = vsel %vm40, %v15, 0
    %v45 = vsel %vm40, %v16, 0
    %v48 = vsel %vm40, %v17, 0
    %v51 = vsel %vm40, %v18, 0
    %v54 = vsel %vm40, %v19, 0
    %v57 = vsel %vm40, %v20, 0
    %v60 = vsel %vm40, %v21, 0
    %v63 = vsel %vm40, %v22, 0
    %v66 = vsel %vm40, %v23, 0
    %v69 = vsel %vm40, %v24, 0
    %v72 = vsel %vm40, %v25, 0
    %v75 = vsel %vm40, %v26, 0
    %v78 = vsel %vm40, %v27, 0
    %v81 = vsel %vm40, %v28, 0
    %v84 = vsel %vm40, %v29, 0
    %v87 = vsel %vm40, %v30, 0
    %v90 = vsel %vm40, %v31, 0
    %v93 = vsel %vm40, %v32, 0
    %95 = vmatprep.subr.mxu0 0.0
    %96 = vmatpush1.xpose.msra.mxu0 %v48
    %97 = vmatprep.subr.mxu0 0.0
    %98 = vmatpush1.xpose.msra.mxu0 %v51
    %99 = vmatprep.subr.mxu0 0.0
    %100 = vmatpush1.xpose.msra.mxu0 %v54
    %101 = vmatprep.subr.mxu0 0.0
    %102 = vmatpush1.xpose.msra.mxu0 %v57
    %103 = vmatprep.subr.mxu0 0.0
    %104 = vmatpush1.xpose.msra.mxu0 %v60
    %105 = vmatprep.subr.mxu0 0.0
    %106 = vmatpush1.xpose.msra.mxu0 %v63
    %107 = vmatprep.subr.mxu0 0.0
    %108 = vmatpush1.xpose.msra.mxu0 %v66
    %109 = vmatprep.subr.mxu0 0.0
    %110 = vmatpush1.xpose.msra.mxu0 %v69
    %111 = vmatprep.subr.mxu0 0.0
    %112 = vmatpush1.xpose.msra.mxu0 %v72
    %113 = vmatprep.subr.mxu0 0.0
    %114 = vmatpush1.xpose.msra.mxu0 %v75
    %115 = vmatprep.subr.mxu0 0.0
    %116 = vmatpush1.xpose.msra.mxu0 %v78
    %117 = vmatprep.subr.mxu0 0.0
    %118 = vmatpush1.xpose.msra.mxu0 %v81
    %119 = vmatprep.subr.mxu0 0.0
    %120 = vmatpush1.xpose.msra.mxu0 %v84
    %121 = vmatprep.subr.mxu0 0.0
    %122 = vmatpush1.xpose.msra.mxu0 %v87
    %123 = vmatprep.subr.mxu0 0.0
    %124 = vmatpush1.xpose.msra.mxu0 %v90
    %125 = vmatprep.subr.mxu0 0.0
    %126 = vmatpush1.xpose.msra.mxu0 %v93
    %127 = vmatprep.subr.mxu0 0.0
    %128 = vmatpush1.xpose.msra.mxu0 0.0
    %129 = vmatprep.subr.mxu0 0.0
    %130 = vmatpush1.xpose.msra.mxu0 0.0
    %131 = vmatprep.subr.mxu0 0.0
    %132 = vmatpush1.xpose.msra.mxu0 0.0
    %133 = vmatprep.subr.mxu0 0.0
    %134 = vmatpush1.xpose.msra.mxu0 0.0
    %135 = vmatprep.subr.mxu0 0.0
    %136 = vmatpush1.xpose.msra.mxu0 0.0
    %137 = vmatprep.subr.mxu0 0.0
    %138 = vmatpush1.xpose.msra.mxu0 0.0
    %139 = vmatprep.subr.mxu0 0.0
    %140 = vmatpush1.xpose.msra.mxu0 0.0
    %141 = vmatprep.subr.mxu0 0.0
    %142 = vmatpush1.xpose.msra.mxu0 0.0
    %143 = vmatprep.subr.mxu0 0.0
    %144 = vmatpush1.xpose.msra.mxu0 0.0
    %145 = vmatprep.subr.mxu0 0.0
    %146 = vmatpush1.xpose.msra.mxu0 0.0
    %147 = vmatprep.subr.mxu0 0.0
    %148 = vmatpush1.xpose.msra.mxu0 0.0
    %149 = vmatprep.subr.mxu0 0.0
    %150 = vmatpush1.xpose.msra.mxu0 0.0
    %151 = vmatprep.subr.mxu0 0.0
    %152 = vmatpush1.xpose.msra.mxu0 0.0
    %153 = vmatprep.subr.mxu0 0.0
    %154 = vmatpush1.xpose.msra.mxu0 0.0
    %155 = vmatprep.subr.mxu0 0.0
    %156 = vmatpush1.xpose.msra.mxu0 0.0
    %157 = vmatprep.subr.mxu0 0.0
    %158 = vmatpush1.xpose.msra.mxu0 0.0
    %159 = vmatprep.mubr.f32.mxu0 0.0
    %160 = vmatmul.mubr.f32.gmra.mrb[0].mxu0 %v42
    %v161 = vpop.f32.mrb[0].mxu0
    %v162 = vadd.f32 %v38, %v161
    %v163 = vpop.f32.mrb[0].mxu0
    %164 = vmatprep.mubr.f32.mxu0 0.0
    %165 = vmatmul.mubr.f32.gmra.mrb[0].mxu0 %v45
    %v166 = vpop.f32.mrb[0].mxu0
    %v167 = vadd.f32 %v38, %v166
    %v168 = vpop.f32.mrb[0].mxu0
    %169 = vdwg.mxu0
    %v170 = vmul.f32 %v162, 0.70710677
    %v171 = vmul.f32 %v167, 0.70710677
    %v172 = vand.u32 2147483647, %v170
    %v173 = vand.u32 2147483647, %v171
    %v174 = vmul.f32 %v172, 0.3275911
    %v175 = vmul.f32 %v173, 0.3275911
    %v176 = vadd.f32 %v174, 1.0
    %v177 = vadd.f32 %v175, 1.0
    %v178 = vrcp.pop %v176
    %v179 = vmul.f32 1.0, %v178
    %v180 = vrcp.pop %v177
    %v181 = vmul.f32 1.0, %v180
    %v182 = vmul.f32 %v179, 1.0614054
    %v183 = vmul.f32 %v181, 1.0614054
    %v184 = vadd.f32 %v182, -1.4531521
    %v185 = vadd.f32 %v183, -1.4531521
    %v186 = vmul.f32 %v179, %v184
    %v187 = vmul.f32 %v181, %v185
    %v188 = vadd.f32 %v186, 1.4214138
    %v189 = vadd.f32 %v187, 1.4214138
    %v190 = vmul.f32 %v179, %v188
    %v191 = vmul.f32 %v181, %v189
    %v192 = vadd.f32 %v190, -0.28449672
    %v193 = vadd.f32 %v191, -0.28449672
    %v194 = vmul.f32 %v179, %v192
    %v195 = vmul.f32 %v181, %v193
    %v196 = vadd.f32 %v194, 0.2548296
    %v197 = vadd.f32 %v195, 0.2548296
    %v198 = vmul.f32 %v179, %v196
    %v199 = vmul.f32 %v181, %v197
    %v200 = vmul.f32 %v172, %v172
    %v201 = vmul.f32 %v173, %v173
    %v202 = vsub.f32 0.0, %v200
    %v203 = vsub.f32 0.0, %v201
    %v204 = vmul.f32 %v202, 1.442695
    %v205 = vpow.pop %v204
    %v206 = vmul.f32 %v203, 1.442695
    %v207 = vpow.pop %v206
    %v208 = vmul.f32 %v198, %v205
    %v209 = vmul.f32 %v199, %v207
    %v210 = vsub.f32 1.0, %v208
    %v211 = vsub.f32 1.0, %v209
    %vm212 = vcmp.lt.f32.partialorder %v170, 0.0
    %vm213 = vcmp.lt.f32.partialorder %v171, 0.0
    %v214 = vsub.f32 0.0, %v210
    %v215 = vsub.f32 0.0, %v211
    %v216 = vsel %vm212, %v214, %v210
    %v217 = vsel %vm213, %v215, %v211
    %v218 = vmul.f32 %v162, 0.5
    %v219 = vmul.f32 %v167, 0.5
    %v220 = vadd.f32 %v216, 1.0
    %v221 = vadd.f32 %v217, 1.0
    %v222 = vmul.f32 %v218, %v220
    %v223 = vmul.f32 %v219, %v221
    %224 = vst [vmem:[#allocation2] sm:$0xff] %v222
    %225 = vst [vmem:[#allocation2 + $0x8] sm:$0xff] %v223
    // Predicated region
    $region14: #{bert_intermediate.1} parent=1 // pred_check
      _
    $region15: #{bert_intermediate.1} parent=1 // pred_check_branch
      %227 = sbr.rel (0) target = $region17
    $region16: #{bert_intermediate.1} parent=1 // pred_region
      %s229 = ssub.s32 256, 256
      %230 = vsyncadd [#allocation3], %s229
      %s231 = sshll.u32 [#allocation2], 4
      %s232 = int_to_ptr.vmem [resolvable:$true] %s231
      %237 = dma.vmem_to_hbm [thread:$0]  %s232, 256, %s3, [#allocation3], 128, 128, 8
    $region17: #{bert_intermediate.1} parent=1 // pred_fallthru
      _
    // Predicated region
    $region18: #{bert_intermediate.1} parent=1 // pred_check
      _
    $region19: #{bert_intermediate.1} parent=1 // pred_check_branch
      %239 = sbr.rel (0) target = $region21
    $region20: #{bert_intermediate.1} parent=1 // pred_region
      %240 = dma.done [#allocation3], 256
    $region21: #{bert_intermediate.1} parent=1 // pred_fallthru
      _
    %241 = vsyncpa [#allocation3], 1

</llo_original>
